<compile_context>
chip_gen: v5e
topology: v5e:2x2
jax: 0.10.0
libtpu: 0.0.40
codegen_flags: <defaults>
</compile_context>

<pallas_src>
import jax
import jax.numpy as jnp
from jax.experimental import pallas as pl
from jax.experimental.pallas import tpu as pltpu


def _dec_init_kernel(x_ref, w_ref, b_ref, o_ref):
    # One MXU matmul (f32 accumulate) + VPU bias add + EUP tanh.
    x = x_ref[...]                      # (bm, Din)
    w = w_ref[...]                      # (Din, Dout)
    b = b_ref[...]                      # (1, Dout) -> broadcasts over rows
    acc = jnp.dot(x, w, preferred_element_type=jnp.float32)    # MXU
    o_ref[...] = jnp.tanh(acc + b).astype(o_ref.dtype)          # VPU + EUP


def dec_init(last_enc_h, weight_t, bias, *, block_b=256, bf16_matmul=None):
    """tanh(last_enc_h @ weight_t + bias)

    last_enc_h: (B, Din) float32
    weight_t:   (Din, Dout) float32   (transposed nn.Linear weight)
    bias:       (Dout,) float32
    """
    B, Din = last_enc_h.shape
    Dout = weight_t.shape[1]
    out_dtype = last_enc_h.dtype
    bias2d = bias.reshape(1, Dout)

    # bf16 MXU operands only pay off at realistic hidden sizes (v6e/v7x MXU is
    # bf16-native); keep f32 for tiny problems to preserve accuracy for free.
    if bf16_matmul is None:
        bf16_matmul = (Din >= 512 and Dout >= 512)
    x = last_enc_h.astype(jnp.bfloat16) if bf16_matmul else last_enc_h
    w = weight_t.astype(jnp.bfloat16) if bf16_matmul else weight_t

    if B >= 2 * block_b:
        # Batch-tiled path: rows sharded across TensorCores (megacore on v7x),
        # weight + bias resident (same block index every step).
        grid = (pl.cdiv(B, block_b),)
        return pl.pallas_call(
            _dec_init_kernel,
            out_shape=jax.ShapeDtypeStruct((B, Dout), out_dtype),
            grid=grid,
            in_specs=[
                pl.BlockSpec((block_b, Din), lambda i: (i, 0)),
                pl.BlockSpec((Din, Dout), lambda i: (0, 0)),
                pl.BlockSpec((1, Dout), lambda i: (0, 0)),
            ],
            out_specs=pl.BlockSpec((block_b, Dout), lambda i: (i, 0)),
            compiler_params=pltpu.CompilerParams(
                dimension_semantics=("parallel",)
            ),
        )(x, w, bias2d)

    # Gridless path: whole problem is a single VMEM tile; no grid, no pipeline
    # machinery, no per-step overhead.
    return pl.pallas_call(
        _dec_init_kernel,
        out_shape=jax.ShapeDtypeStruct((B, Dout), out_dtype),
        in_specs=[
            pl.BlockSpec(memory_space=pltpu.MemorySpace.VMEM),
            pl.BlockSpec(memory_space=pltpu.MemorySpace.VMEM),
            pl.BlockSpec(memory_space=pltpu.MemorySpace.VMEM),
        ],
        out_specs=pl.BlockSpec(memory_space=pltpu.MemorySpace.VMEM),
    )(x, w, bias2d)


if __name__ == "__main__":
    # opt.brnn = True  -> num_directions = 2
    # opt.enc_rnn_size = 64 -> initer in_features = 32
    # opt.dec_rnn_size = 32 -> initer out_features = 32
    enc_rnn_size = 64
    num_directions = 2
    dec_rnn_size = 32
    in_features = enc_rnn_size // num_directions
    batch = 2

    key = jax.random.PRNGKey(0)
    k_x, k_w, k_b, k_x2 = jax.random.split(key, 4)

    # Deterministic synthetic parameters (not a checkpoint load).
    last_enc_h = jax.random.normal(k_x, (batch, in_features), dtype=jnp.float32)
    weight = jax.random.normal(k_w, (dec_rnn_size, in_features), dtype=jnp.float32) * 0.1
    bias = jax.random.normal(k_b, (dec_rnn_size,), dtype=jnp.float32) * 0.1
    weight_t = weight.T  # (in_features, dec_rnn_size)

    # Small case: gridless single-tile kernel.
    out = jax.block_until_ready(dec_init(last_enc_h, weight_t, bias))
    ref = jnp.tanh(last_enc_h @ weight_t + bias[None, :])
    assert out.shape == (batch, dec_rnn_size)
    assert jnp.allclose(out, ref, atol=1e-5, rtol=1e-5)

    # Larger batch (incl. non-multiple of block): tiled / parallel path.
    big_batch = 300
    x_big = jax.random.normal(k_x2, (big_batch, in_features), dtype=jnp.float32)
    out_big = jax.block_until_ready(dec_init(x_big, weight_t, bias, block_b=128))
    ref_big = jnp.tanh(x_big @ weight_t + bias[None, :])
    assert out_big.shape == (big_batch, dec_rnn_size)
    assert jnp.allclose(out_big, ref_big, atol=1e-5, rtol=1e-5)

    print("KERNEL_OK")
</pallas_src>

<mosaic_0001>
module attributes {stable_mosaic.version = 11 : i64} {
  func.func @_dec_init_kernel(%arg0: memref<2x32xf32, #tpu.memory_space<vmem>>, %arg1: memref<32x32xf32, #tpu.memory_space<vmem>>, %arg2: memref<1x32xf32, #tpu.memory_space<vmem>>, %arg3: memref<2x32xf32, #tpu.memory_space<vmem>>) attributes {dimension_semantics = [], scalar_prefetch = 0 : i64, scratch_operands = 0 : i64, tpu.core_type = #tpu.core_type<tc>} {
    %c0 = arith.constant 0 : index
    %c0_0 = arith.constant 0 : index
    %0 = vector.load %arg0[%c0, %c0_0] : memref<2x32xf32, #tpu.memory_space<vmem>>, vector<2x32xf32>
    %c0_1 = arith.constant 0 : index
    %c0_2 = arith.constant 0 : index
    %1 = vector.load %arg1[%c0_1, %c0_2] : memref<32x32xf32, #tpu.memory_space<vmem>>, vector<32x32xf32>
    %c0_3 = arith.constant 0 : index
    %c0_4 = arith.constant 0 : index
    %2 = vector.load %arg2[%c0_3, %c0_4] : memref<1x32xf32, #tpu.memory_space<vmem>>, vector<1x32xf32>
    %cst = arith.constant dense<0.000000e+00> : vector<2x32xf32>
    %3 = tpu.matmul %0, %1, %cst {dimension_numbers = #tpu.dot_dimension_numbers<[1], [0], [0], [1], [0, 0, 1, 1], [], []>} : vector<2x32xf32>, vector<32x32xf32>, vector<2x32xf32> -> vector<2x32xf32>
    %4 = vector.broadcast %2 : vector<1x32xf32> to vector<2x32xf32>
    %5 = arith.addf %3, %4 : vector<2x32xf32>
    %6 = math.tanh %5 : vector<2x32xf32>
    %c0_5 = arith.constant 0 : index
    %c0_6 = arith.constant 0 : index
    %7 = vector.load %arg3[%c0_5, %c0_6] : memref<2x32xf32, #tpu.memory_space<vmem>>, vector<2x32xf32>
    tpu.vector_store %arg3[%c0_5, %c0_6], %6 {strides = array<i32>} : memref<2x32xf32, #tpu.memory_space<vmem>>, vector<2x32xf32>,
    return
  }
}

</mosaic_0001>

<llo_original>
// kernel: tpu_custom_call.1
$region0: #{tpu_custom_call.1}
  #allocation0 [shape = 'u32[]', space=smem, size = 0x4, offset = 0x4, fixed_abs, tag = 'smem constant byte address 0x4 - core index']
  #allocation1 [shape = 'u32[72,128]{1,0:T(1,128)}', space=vmem, size = 0x9000, scoped, tag = 'internal scratch']
  %s0 = inlined_call_operand.hbm [shape: f32[2,32], index: 0, kind: input, shape index: {}]
  %s1 = inlined_call_operand.hbm [shape: f32[32,32], index: 1, kind: input, shape index: {}]
  %s2 = inlined_call_operand.vmem [shape: f32[1,32], index: 2, kind: input, shape index: {}]
  %s3 = inlined_call_operand.hbm [shape: f32[2,32], index: 3, kind: output, shape index: {}]
  %s4 = sld [smem:[#allocation0]]
  $region30: #{tpu_custom_call.1} parent=0
    _
  %s6 = ssub.s32 1, %s4
  %s7 = scalar_select 0, %s6, %s4
  $region1: #{tpu_custom_call.1} parent=0
    #allocation2 [shape = 'u8[1024]{0}', space=vmem, size = 0x400, scoped, tag = 'input window, operand 0, single buffered']
    #allocation3 [shape = 's32[1]{0}', space=sflag, size = 0x4, scoped, tag = 'scoped memory for tpu_custom_call.1']
    #allocation4 [shape = 's32[1]{0}', space=sflag, size = 0x4, scoped, tag = 'scoped memory for tpu_custom_call.1']
    #allocation5 [shape = 'u8[16384]{0}', space=vmem, size = 0x4000, scoped, tag = 'input window, operand 1, single buffered']
    #allocation6 [shape = 's32[1]{0}', space=sflag, size = 0x4, scoped, tag = 'scoped memory for tpu_custom_call.1']
    #allocation7 [shape = 'u8[1024]{0}', space=vmem, size = 0x400, scoped, tag = 'output window, operand 0, single buffered']
    %8 = vsyncpa [#allocation3], 0
    %9 = vsyncpa [#allocation6], 0
    %10 = vsyncpa [#allocation4], 0
    // Predicated region
    $region2: #{tpu_custom_call.1} parent=1 // pred_check
      _
    $region3: #{tpu_custom_call.1} parent=1 // pred_check_branch
      %12 = sbr.rel (0) target = $region5
    $region4: #{tpu_custom_call.1} parent=1 // pred_region
      %14 = vsyncadd [#allocation3], 0
      %s16 = sshll.u32 %s0, 4
      %s17 = int_to_ptr.hbm [resolvable:$true] %s16
      %s18 = sshll.u32 [#allocation2], 4
      %s19 = int_to_ptr.vmem [resolvable:$true] %s18
      %21 = dma.hbm_to_vmem [thread:$0]  %s17, 32, %s19, [#allocation3]
    $region5: #{tpu_custom_call.1} parent=1 // pred_fallthru
      _
    // Predicated region
    $region6: #{tpu_custom_call.1} parent=1 // pred_check
      _
    $region7: #{tpu_custom_call.1} parent=1 // pred_check_branch
      %23 = sbr.rel (0) target = $region9
    $region8: #{tpu_custom_call.1} parent=1 // pred_region
      %25 = vsyncadd [#allocation6], 0
      %s26 = sshll.u32 %s1, 4
      %s27 = int_to_ptr.hbm [resolvable:$true] %s26
      %s28 = sshll.u32 [#allocation5], 4
      %s29 = int_to_ptr.vmem [resolvable:$true] %s28
      %34 = dma.hbm_to_vmem [thread:$0]  %s27, 512, %s29, [#allocation6], 128, 128, 8
    $region9: #{tpu_custom_call.1} parent=1 // pred_fallthru
      _
    // Predicated region
    $region10: #{tpu_custom_call.1} parent=1 // pred_check
      _
    $region11: #{tpu_custom_call.1} parent=1 // pred_check_branch
      %36 = sbr.rel (0) target = $region13
    $region12: #{tpu_custom_call.1} parent=1 // pred_region
      _
    $region13: #{tpu_custom_call.1} parent=1 // pred_fallthru
      _
    // Predicated region
    $region14: #{tpu_custom_call.1} parent=1 // pred_check
      _
    $region15: #{tpu_custom_call.1} parent=1 // pred_check_branch
      %38 = sbr.rel (0) target = $region17
    $region16: #{tpu_custom_call.1} parent=1 // pred_region
      %40 = dma.done [#allocation3], 32
    $region17: #{tpu_custom_call.1} parent=1 // pred_fallthru
      _
    // Predicated region
    $region18: #{tpu_custom_call.1} parent=1 // pred_check
      _
    $region19: #{tpu_custom_call.1} parent=1 // pred_check_branch
      %42 = sbr.rel (0) target = $region21
    $region20: #{tpu_custom_call.1} parent=1 // pred_region
      %44 = dma.done [#allocation6], 512
    $region21: #{tpu_custom_call.1} parent=1 // pred_fallthru
      _
    %v45 = vld [vmem:[#allocation2] sm:$0x3]
    %v46 = vld [vmem:[#allocation5] sm:$0xff]
    %v47 = vld [vmem:[#allocation5 + $0x8] sm:$0xff]
    %v48 = vld [vmem:[#allocation5 + $0x10] sm:$0xff]
    %v49 = vld [vmem:[#allocation5 + $0x18] sm:$0xff]
    %v50 = vld [vmem:[%s2] sm:$0x1]
    %v52 = vperm.slane %v50, 0
    %vm54 = vcmask 261120
    %v56 = vsel %vm54, %v45, 0
    %58 = vmatpush.msra.mxu0 0.0
    %59 = vmatpush.msra.mxu0 0.0
    %60 = vmatpush.msra.mxu0 0.0
    %61 = vmatpush.msra.mxu0 0.0
    %62 = vmatpush.msra.mxu0 0.0
    %63 = vmatpush.msra.mxu0 0.0
    %64 = vmatpush.msra.mxu0 0.0
    %65 = vmatpush.msra.mxu0 0.0
    %66 = vmatpush.msra.mxu0 0.0
    %67 = vmatpush.msra.mxu0 0.0
    %68 = vmatpush.msra.mxu0 0.0
    %69 = vmatpush.msra.mxu0 0.0
    %70 = vmatpush.msra.mxu0 %v49
    %71 = vmatpush.msra.mxu0 %v48
    %72 = vmatpush.msra.mxu0 %v47
    %73 = vmatpush.msra.mxu0 %v46
    %74 = vmatmul.f32.gmra.mxu0 %v56
    %v75 = vpop.f32.mrf.mxu0
    %v76 = vadd.f32 %v52, %v75
    %77 = vdwg.mxu0
    %v78 = vtanh.pop %v76
    %vm79 = vcmask 254976
    %80 = vst.msk [vmem:[#allocation7] sm:$0x3] %vm79, %v78
    // Predicated region
    $region22: #{tpu_custom_call.1} parent=1 // pred_check
      _
    $region23: #{tpu_custom_call.1} parent=1 // pred_check_branch
      %82 = sbr.rel (0) target = $region25
    $region24: #{tpu_custom_call.1} parent=1 // pred_region
      %84 = vsyncadd [#allocation4], 0
      %s86 = sshll.u32 [#allocation7], 4
      %s87 = int_to_ptr.vmem [resolvable:$true] %s86
      %s88 = sshll.u32 %s3, 4
      %s89 = int_to_ptr.hbm [resolvable:$true] %s88
      %91 = dma.vmem_to_hbm [thread:$0]  %s87, 32, %s89, [#allocation4]
    $region25: #{tpu_custom_call.1} parent=1 // pred_fallthru
      _
    // Predicated region
    $region26: #{tpu_custom_call.1} parent=1 // pred_check
      _
    $region27: #{tpu_custom_call.1} parent=1 // pred_check_branch
      %93 = sbr.rel (0) target = $region29
    $region28: #{tpu_custom_call.1} parent=1 // pred_region
      %95 = dma.done [#allocation4], 32
    $region29: #{tpu_custom_call.1} parent=1 // pred_fallthru
      _
    %96 = vsyncpa [#allocation3], 1
    %97 = vsyncpa [#allocation6], 1
    %98 = vsyncpa [#allocation4], 1

</llo_original>
